<compile_context>
chip_gen: v6e
topology: v6e:2x2x1
jax: 0.10.0
libtpu: 0.0.40
codegen_flags: <defaults>
</compile_context>

<pallas_src>
import jax
import jax.numpy as jnp
from jax import lax
from jax.experimental import pallas as pl
from jax.experimental.pallas import tpu as pltpu


# ----------------------------------------------------------------------------
# Prefill path:  out[TM, TN] = x_tile[TM, K] @ w_tile[TN, K].T   (bf16 -> f32)
# ----------------------------------------------------------------------------
def _prefill_kernel(x_ref, w_ref, o_ref):
    o_ref[...] = lax.dot_general(
        x_ref[...], w_ref[...],
        dimension_numbers=(((1,), (1,)), ((), ())),   # contract in_features
        preferred_element_type=jnp.float32,
    ).astype(o_ref.dtype)


def up_prefill(x, weight, *, tm=256, tn=256, out_dtype=None):
    """x: (B, S, K), weight: (N, K) bf16 -> (B, S, N) = x @ weight.T"""
    B, S, K = x.shape
    N, _ = weight.shape
    out_dtype = out_dtype or x.dtype
    M = B * S
    tm = min(tm, M)
    tn = min(tn, N)
    assert M % tm == 0 and N % tn == 0, (M, tm, N, tn)

    x2 = x.reshape(M, K).astype(weight.dtype)   # feed MXU in the weight dtype

    cost = pl.CostEstimate(
        flops=2 * M * N * K,
        transcendentals=0,
        bytes_accessed=(M * K + N * K) * weight.dtype.itemsize
                       + M * N * jnp.dtype(out_dtype).itemsize,
    )

    out = pl.pallas_call(
        _prefill_kernel,
        out_shape=jax.ShapeDtypeStruct((M, N), out_dtype),
        grid_spec=pltpu.PrefetchScalarGridSpec(
            num_scalar_prefetch=0,
            grid=(M // tm, N // tn),
            in_specs=[
                pl.BlockSpec((tm, K), lambda i, j: (i, 0)),   # activation tile
                pl.BlockSpec((tn, K), lambda i, j: (j, 0)),   # weight row tile
            ],
            out_specs=pl.BlockSpec((tm, tn), lambda i, j: (i, j)),
        ),
        compiler_params=pltpu.CompilerParams(
            dimension_semantics=("parallel", "parallel"),
            vmem_limit_bytes=48 * 1024 * 1024,
        ),
        cost_estimate=cost,
    )(x2, weight)
    return out.reshape(B, S, N)


# ----------------------------------------------------------------------------
# Decode path: per grid step, DMA-gather `tr` activated weight rows from HBM
# (rolling window of `nsem` concurrent row DMAs), then
#   out[B, tr] = x[B, K] @ gathered[tr, K].T
# ----------------------------------------------------------------------------
def _make_decode_kernel(tr, nsem):
    def kernel(act_ref, x_ref, w_hbm, o_ref, wbuf, sems):
        j = pl.program_id(0)
        base = j * tr

        # Issue single-row HBM->VMEM copies, keeping up to `nsem` in flight.
        @pl.loop(0, tr)
        def _gather(i):
            @pl.when(i >= nsem)
            def _():
                pltpu.make_async_copy(
                    w_hbm.at[pl.ds(0, 1), :],
                    wbuf.at[pl.ds(i - nsem, 1), :],
                    sems.at[i % nsem],
                ).wait()
            row = act_ref[base + i]
            pltpu.make_async_copy(
                w_hbm.at[pl.ds(row, 1), :],
                wbuf.at[pl.ds(i, 1), :],
                sems.at[i % nsem],
            ).start()

        # Drain the last `nsem` outstanding row copies.
        @pl.loop(tr, tr + nsem)
        def _drain(i):
            pltpu.make_async_copy(
                w_hbm.at[pl.ds(0, 1), :],
                wbuf.at[pl.ds(i - nsem, 1), :],
                sems.at[i % nsem],
            ).wait()

        o_ref[...] = lax.dot_general(
            x_ref[...], wbuf[...],
            dimension_numbers=(((1,), (1,)), ((), ())),   # contract in_features
            preferred_element_type=jnp.float32,
        ).astype(o_ref.dtype)

    return kernel


def up_decode(x, weight, act_idx, *, tr=256, max_inflight=32, out_dtype=None):
    """x: (B, 1, K), weight: (N, K) f32, act_idx: (R,) int32 -> (B, 1, R)."""
    B, S, K = x.shape
    assert S == 1
    N, _ = weight.shape
    R = act_idx.shape[0]
    out_dtype = out_dtype or x.dtype
    tr = min(tr, R)
    assert R % tr == 0, (R, tr)
    nsem = max(1, min(max_inflight, tr))

    x2 = x.reshape(B, K).astype(weight.dtype)

    cost = pl.CostEstimate(
        flops=2 * B * R * K,
        transcendentals=0,
        bytes_accessed=(B * K + R * K) * weight.dtype.itemsize
                       + B * R * jnp.dtype(out_dtype).itemsize,
    )

    out = pl.pallas_call(
        _make_decode_kernel(tr, nsem),
        out_shape=jax.ShapeDtypeStruct((B, R), out_dtype),
        grid_spec=pltpu.PrefetchScalarGridSpec(
            num_scalar_prefetch=1,                       # act_idx -> SMEM
            grid=(R // tr,),
            in_specs=[
                pl.BlockSpec((B, K), lambda j, act: (0, 0)),   # x stays resident
                pl.BlockSpec(memory_space=pl.ANY),             # weight stays in HBM
            ],
            out_specs=pl.BlockSpec((B, tr), lambda j, act: (0, j)),
            scratch_shapes=[
                pltpu.VMEM((tr, K), weight.dtype),             # gathered rows
                pltpu.SemaphoreType.DMA((nsem,)),
            ],
        ),
        compiler_params=pltpu.CompilerParams(
            dimension_semantics=("parallel",),
            vmem_limit_bytes=32 * 1024 * 1024,
        ),
        cost_estimate=cost,
    )(act_idx, x2, weight)
    return out.reshape(B, 1, R)


# ----------------------------------------------------------------------------
# UpLayer wrapper (mirrors the PyTorch module's forward dispatch)
# ----------------------------------------------------------------------------
class UpLayerPallas:
    def __init__(self, weight, act_list, sparsity, memory_limit,
                 decode_tile=256, prefill_tiles=(256, 256)):
        weight = jnp.asarray(weight)
        self.remained_neurons = int(weight.shape[0] * sparsity)
        self.memory_limit = memory_limit          # no-op on TPU: weight stays in HBM
        # Decode gathers f32 rows (32-bit DMA granularity); prefill streams a
        # bf16 copy through the MXU (f32 accumulation).
        self.weight = weight.astype(jnp.float32)                 # (N, K) decode
        self.weight_lp = weight.astype(jnp.bfloat16)             # (N, K) prefill
        # NOTE: torch does `act_list[:][:remained_neurons]` (slices the CLUSTER
        # axis); the evident intent (filtered_W has remained_neurons rows) is a
        # per-cluster neuron slice, done here.
        self.act_list = jnp.asarray(act_list, dtype=jnp.int32)[:, :self.remained_neurons]
        self.decode_tile = decode_tile
        self.prefill_tiles = prefill_tiles

    def forward(self, x, global_cluster):
        if x.shape[1] > 1:
            tm, tn = self.prefill_tiles
            return up_prefill(x, self.weight_lp, tm=tm, tn=tn, out_dtype=x.dtype)
        act_idx = self.act_list[global_cluster]
        return up_decode(x, self.weight, act_idx,
                         tr=self.decode_tile, out_dtype=x.dtype)


if __name__ == "__main__":
    key = jax.random.PRNGKey(0)
    k_w, k_xp, k_xd, k_a0, k_a1 = jax.random.split(key, 5)

    B, S, K, N = 2, 8, 128, 512        # batch, seq, in_features, out_features
    sparsity = 0.5                     # remained_neurons = 256
    global_cluster = 0

    weight = jax.random.normal(k_w, (N, K), dtype=jnp.float32) * 0.02
    # Per-cluster ranked neuron lists, shaped (num_clusters, N) like the module.
    act_list = jnp.stack([jax.random.permutation(k_a0, N),
                          jax.random.permutation(k_a1, N)]).astype(jnp.int32)

    layer = UpLayerPallas(weight, act_list, sparsity, memory_limit=False,
                          decode_tile=128)      # 128 -> multi-step decode grid
    R = layer.remained_neurons
    w_bf = layer.weight_lp

    # --- prefill path (seq > 1): bf16 weights, f32 accumulation ---
    x_prefill = jax.random.normal(k_xp, (B, S, K), dtype=jnp.float32)
    y_prefill = jax.block_until_ready(layer.forward(x_prefill, global_cluster))
    ref_prefill = (x_prefill.astype(jnp.bfloat16).astype(jnp.float32)
                   @ w_bf.astype(jnp.float32).T)
    assert y_prefill.shape == (B, S, N)
    assert y_prefill.dtype == x_prefill.dtype
    assert jnp.allclose(y_prefill, ref_prefill, atol=2e-3, rtol=2e-3)

    # --- decode path (seq == 1): in-kernel HBM row gather of R rows ---
    x_decode = jax.random.normal(k_xd, (B, 1, K), dtype=jnp.float32)
    y_decode = jax.block_until_ready(layer.forward(x_decode, global_cluster))
    act_idx = layer.act_list[global_cluster]
    ref_decode = x_decode @ weight[act_idx, :].T
    assert y_decode.shape == (B, 1, R)
    assert jnp.allclose(y_decode, ref_decode, atol=1e-4, rtol=1e-4)

    print("KERNEL_OK")
</pallas_src>

<mosaic_0001>
module attributes {stable_mosaic.version = 11 : i64} {
  func.func @_prefill_kernel(%arg0: i32, %arg1: i32, %arg2: memref<16x128xbf16, #tpu.memory_space<vmem>>, %arg3: memref<256x128xbf16, #tpu.memory_space<vmem>>, %arg4: memref<16x256xf32, #tpu.memory_space<vmem>>) attributes {dimension_semantics = [#tpu.dimension_semantics<parallel>, #tpu.dimension_semantics<parallel>], iteration_bounds = array<i64: 1, 2>, scalar_prefetch = 0 : i64, scratch_operands = 0 : i64, tpu.core_type = #tpu.core_type<tc>, window_params = [{transform_indices = @transform_0, window_bounds = array<i64: 16, 128>}, {transform_indices = @transform_1, window_bounds = array<i64: 256, 128>}, {transform_indices = @transform_2, window_bounds = array<i64: 16, 256>}]} {
    %c0 = arith.constant 0 : index
    %c0_0 = arith.constant 0 : index
    %0 = vector.load %arg2[%c0, %c0_0] : memref<16x128xbf16, #tpu.memory_space<vmem>>, vector<16x128xbf16>
    %c0_1 = arith.constant 0 : index
    %c0_2 = arith.constant 0 : index
    %1 = vector.load %arg3[%c0_1, %c0_2] : memref<256x128xbf16, #tpu.memory_space<vmem>>, vector<256x128xbf16>
    %cst = arith.constant dense<0.000000e+00> : vector<16x256xf32>
    %2 = tpu.matmul %0, %1, %cst {dimension_numbers = #tpu.dot_dimension_numbers<[1], [1], [0], [0], [0, 0, 1, 0], [], []>} : vector<16x128xbf16>, vector<256x128xbf16>, vector<16x256xf32> -> vector<16x256xf32>
    %c0_3 = arith.constant 0 : index
    %c0_4 = arith.constant 0 : index
    %3 = vector.load %arg4[%c0_3, %c0_4] : memref<16x256xf32, #tpu.memory_space<vmem>>, vector<16x256xf32>
    tpu.vector_store %arg4[%c0_3, %c0_4], %2 {strides = array<i32>} : memref<16x256xf32, #tpu.memory_space<vmem>>, vector<16x256xf32>,
    return
  }
  func.func @transform_0(%arg0: i32, %arg1: i32) -> (i32, i32) {
    %c0_i32 = arith.constant 0 : i32
    %c0_i32_0 = arith.constant 0 : i32
    return %arg0, %c0_i32 : i32, i32
  }
  func.func @transform_1(%arg0: i32, %arg1: i32) -> (i32, i32) {
    %c0_i32 = arith.constant 0 : i32
    %c0_i32_0 = arith.constant 0 : i32
    return %arg1, %c0_i32 : i32, i32
  }
  func.func @transform_2(%arg0: i32, %arg1: i32) -> (i32, i32) {
    %c0_i32 = arith.constant 0 : i32
    return %arg0, %arg1 : i32, i32
  }
}

</mosaic_0001>

<llo_original>
// kernel: tpu_custom_call.1
$region0: #{tpu_custom_call.1}
  #allocation0 [shape = 'u32[]', space=smem, size = 0x4, offset = 0x4, fixed_abs, tag = 'smem constant byte address 0x4 - core index']
  #allocation1 [shape = 'u32[144,128]{1,0:T(1,128)}', space=vmem, size = 0x12000, scoped, tag = 'internal scratch']
  %s0 = inlined_call_operand.hbm [shape: bf16[16,128], index: 0, kind: input, shape index: {}]
  %s1 = inlined_call_operand.hbm [shape: bf16[512,128], index: 1, kind: input, shape index: {}]
  %s2 = inlined_call_operand.hbm [shape: f32[16,512], index: 2, kind: output, shape index: {}]
  %s3 = sld [smem:[#allocation0]]
  $region49: #{tpu_custom_call.1} parent=0
    _
  %s5 = ssub.s32 1, %s3
  %s6 = scalar_select 0, %s5, %s3
  $region1: #{tpu_custom_call.1} parent=0
    #allocation2 [shape = 'u8[4096]{0}', space=vmem, size = 0x1000, scoped, tag = 'input window, operand 0, single buffered']
    #allocation3 [shape = 's32[2]{0}', space=sflag, size = 0x8, scoped, tag = 'scoped memory for tpu_custom_call.1']
    #allocation4 [shape = 's32[2]{0}', space=sflag, size = 0x8, scoped, tag = 'scoped memory for tpu_custom_call.1']
    #allocation5 [shape = 'u8[131072]{0}', space=vmem, size = 0x20000, scoped, tag = 'input window, operand 1']
    #allocation6 [shape = 's32[2]{0}', space=sflag, size = 0x8, scoped, tag = 'scoped memory for tpu_custom_call.1']
    #allocation7 [shape = 'u8[32768]{0}', space=vmem, size = 0x8000, scoped, tag = 'output window, operand 0']
    %7 = vsyncpa [#allocation3], 0
    %8 = vsyncpa [#allocation6], 0
    %s9 = scalar_lea.sflag [#allocation6], 1
    %10 = vsyncpa %s9, 0
    %11 = vsyncpa [#allocation4], 0
    %s12 = scalar_lea.sflag [#allocation4], 1
    %13 = vsyncpa %s12, 0
    loop: start=0, step=1, limit=4
    $region2: #{tpu_custom_call.1} parent=1 // loop_pre_header
      _
    $region3: #{tpu_custom_call.1} parent=1 // loop_header
      %s15 = sphi 0, %s19
      %p16 = scmp.ge.s32.totalorder %s15, 4
      %s22 = sphi 0, %s34
      %s23 = sphi 0, %s30
      %s24 = sphi 0, %s22
      %s25 = sphi 0, %s23
      %s26 = sphi 0, %s24
      %s27 = sphi 0, %s25
      %s37 = sphi 0, %s39
      %s40 = sphi 0, %s37
      %s41 = sphi 0, %s40
      %s57 = sphi 0, %s41
      %s63 = sphi 0, %s65
      %s66 = sphi 0, %s63
      %s67 = sphi 0, %s66
      %s83 = sphi 0, %s67
      %s91 = sphi 0, %s93
      %s94 = sphi 0, %s91
      %s95 = sphi 0, %s94
      %s111 = sphi 0, %s95
    $region4: #{tpu_custom_call.1} parent=1 // loop_header_branch
      %18 = sbr.rel (%p16) target = $region8
    $region5: #{tpu_custom_call.1} parent=1 // loop_body
      %s20 = ssub.s32 %s15, 1
      %s21 = ssub.s32 %s15, 2
      %s28 = sadd.s32 1, %s23
      %p29 = scmp.ge.s32.totalorder %s28, 2
      %s30 = scalar_select %p29, 0, %s28
      %s31 = sadd.s32 1, %s22
      %s32 = scalar_select %p29, %s31, %s22
      %p33 = scmp.ge.s32.totalorder %s32, 1
      %s34 = scalar_select %p33, 0, %s32
      %s35 = ssub.s32 %s22, %s34
      %p36 = scmp.eq.s32.totalorder %s35, 0
      %s38 = sadd.s32 %s37, 1
      %s39 = scalar_select %p36, %s37, %s38
      %p42 = pneg %p36
      %p43 = scmp.eq.s32.totalorder %s15, 1
      %p44 = por %p42, %p43
      %p45 = scmp.ne.s32.totalorder %s37, %s40
      %p46 = scmp.eq.s32.totalorder %s15, 0
      %p47 = por %p45, %p46
      %p48 = scmp.ne.s32.totalorder %s37, %s40
      %p49 = scmp.eq.s32.totalorder %s20, 1
      %p50 = por %p48, %p49
      %p51 = scmp.ne.s32.totalorder %s40, %s41
      %p52 = scmp.eq.s32.totalorder %s20, 0
      %p53 = por %p51, %p52
      %p54 = scmp.ne.s32.totalorder %s40, %s41
      %p55 = scmp.eq.s32.totalorder %s21, 1
      %p56 = por %p54, %p55
      %p58 = scmp.ne.s32.totalorder %s41, %s57
      %p59 = scmp.eq.s32.totalorder %s21, 0
      %p60 = por %p58, %p59
      %s61 = ssub.s32 %s23, %s30
      %p62 = scmp.eq.s32.totalorder %s61, 0
      %s64 = sadd.s32 %s63, 1
      %s65 = scalar_select %p62, %s63, %s64
      %p68 = pneg %p62
      %p69 = scmp.eq.s32.totalorder %s15, 1
      %p70 = por %p68, %p69
      %p71 = scmp.ne.s32.totalorder %s63, %s66
      %p72 = scmp.eq.s32.totalorder %s15, 0
      %p73 = por %p71, %p72
      %p74 = scmp.ne.s32.totalorder %s63, %s66
      %p75 = scmp.eq.s32.totalorder %s20, 1
      %p76 = por %p74, %p75
      %p77 = scmp.ne.s32.totalorder %s66, %s67
      %p78 = scmp.eq.s32.totalorder %s20, 0
      %p79 = por %p77, %p78
      %p80 = scmp.ne.s32.totalorder %s66, %s67
      %p81 = scmp.eq.s32.totalorder %s21, 1
      %p82 = por %p80, %p81
      %p84 = scmp.ne.s32.totalorder %s67, %s83
      %p85 = scmp.eq.s32.totalorder %s21, 0
      %p86 = por %p84, %p85
      %s87 = ssub.s32 %s22, %s34
      %s88 = ssub.s32 %s23, %s30
      %s89 = sor.u32 %s87, %s88
      %p90 = scmp.eq.s32.totalorder %s89, 0
      %s92 = sadd.s32 %s91, 1
      %s93 = scalar_select %p90, %s91, %s92
      %p96 = pneg %p90
      %p97 = scmp.eq.s32.totalorder %s15, 1
      %p98 = por %p96, %p97
      %p99 = scmp.ne.s32.totalorder %s91, %s94
      %p100 = scmp.eq.s32.totalorder %s15, 0
      %p101 = por %p99, %p100
      %p102 = scmp.ne.s32.totalorder %s91, %s94
      %p103 = scmp.eq.s32.totalorder %s20, 1
      %p104 = por %p102, %p103
      %p105 = scmp.ne.s32.totalorder %s94, %s95
      %p106 = scmp.eq.s32.totalorder %s20, 0
      %p107 = por %p105, %p106
      %p108 = scmp.ne.s32.totalorder %s94, %s95
      %p109 = scmp.eq.s32.totalorder %s21, 1
      %p110 = por %p108, %p109
      %p112 = scmp.ne.s32.totalorder %s95, %s111
      %p113 = scmp.eq.s32.totalorder %s21, 0
      %p114 = por %p112, %p113
      %p115 = scmp.le.s32.totalorder 1, %s15
      %p116 = scmp.lt.s32.totalorder %s15, 3
      %p117 = pnand %p115, %p116
      %p118 = pneg %p117
      // Predicated region
      $region9: #{tpu_custom_call.1} parent=5 // pred_check
        _
      $region10: #{tpu_custom_call.1} parent=5 // pred_check_branch
        %120 = sbr.rel (%p117) target = $region12
      $region11: #{tpu_custom_call.1} parent=5 // pred_region
        %s121 = ssub.s32 %s15, 1
        // Predicated region
        $region13: #{tpu_custom_call.1} parent=11 // pred_check
          %p122 = pneg %p53
        $region14: #{tpu_custom_call.1} parent=11 // pred_check_branch
          %124 = sbr.rel (%p122) target = $region16
        $region15: #{tpu_custom_call.1} parent=11 // pred_region
          %s125 = smul.u32 2, %s24
          %s127 = ssub.s32 128, 128
          %128 = vsyncadd [#allocation3], %s127
          %s129 = smul.addr %s125, 64
          %s130 = scalar_lea.hbm %s0, %s129
          %s131 = sshll.u32 [#allocation2], 4
          %s132 = int_to_ptr.vmem [resolvable:$true] %s131
          %137 = dma.hbm_to_vmem [thread:$0]  %s130, 128, %s132, [#allocation3], 64, 64, 4
        $region16: #{tpu_custom_call.1} parent=11 // pred_fallthru
          _
      $region12: #{tpu_custom_call.1} parent=5 // pred_fallthru
        _
      %p138 = scmp.lt.s32.totalorder %s15, 2
      // Predicated region
      $region17: #{tpu_custom_call.1} parent=5 // pred_check
        %p139 = pneg %p138
      $region18: #{tpu_custom_call.1} parent=5 // pred_check_branch
        %141 = sbr.rel (%p139) target = $region20
      $region19: #{tpu_custom_call.1} parent=5 // pred_region
        // Predicated region
        $region21: #{tpu_custom_call.1} parent=19 // pred_check
          %p142 = pneg %p73
        $region22: #{tpu_custom_call.1} parent=19 // pred_check_branch
          %144 = sbr.rel (%p142) target = $region24
        $region23: #{tpu_custom_call.1} parent=19 // pred_region
          %s145 = sand.u32 %s63, 1
          %s146 = scalar_lea.sflag [#allocation6], %s145
          %s147 = sand.u32 %s63, 1
          %s148 = smul.addr %s147, 128
          %s149 = scalar_lea.vmem [#allocation5], %s148
          %s150 = smul.u32 32, %s23
          %s152 = ssub.s32 2048, 2048
          %153 = vsyncadd %s146, %s152
          %s154 = smul.addr %s150, 64
          %s155 = scalar_lea.hbm %s1, %s154
          %s156 = sshll.u32 %s149, 4
          %s157 = int_to_ptr.vmem [resolvable:$true] %s156
          %162 = dma.hbm_to_vmem [thread:$0]  %s155, 2048, %s157, %s146, 64, 64, 4
        $region24: #{tpu_custom_call.1} parent=19 // pred_fallthru
          _
      $region20: #{tpu_custom_call.1} parent=5 // pred_fallthru
        _
      %p163 = scmp.le.s32.totalorder 1, %s15
      %p164 = scmp.lt.s32.totalorder %s15, 3
      %p165 = pnand %p163, %p164
      %p166 = pneg %p165
      // Predicated region
      $region25: #{tpu_custom_call.1} parent=5 // pred_check
        _
      $region26: #{tpu_custom_call.1} parent=5 // pred_check_branch
        %168 = sbr.rel (%p165) target = $region28
      $region27: #{tpu_custom_call.1} parent=5 // pred_region
        %s169 = ssub.s32 %s15, 1
        // Predicated region
        $region29: #{tpu_custom_call.1} parent=27 // pred_check
          %p170 = pneg %p53
        $region30: #{tpu_custom_call.1} parent=27 // pred_check_branch
          %172 = sbr.rel (%p170) target = $region32
        $region31: #{tpu_custom_call.1} parent=27 // pred_region
          %173 = dma.done [#allocation3], 128
        $region32: #{tpu_custom_call.1} parent=27 // pred_fallthru
          _
        %s174 = sand.u32 %s66, 1
        %s175 = scalar_lea.sflag [#allocation6], %s174
        %s176 = sand.u32 %s66, 1
        %s177 = smul.addr %s176, 128
        %s178 = scalar_lea.vmem [#allocation5], %s177
        // Predicated region
        $region33: #{tpu_custom_call.1} parent=27 // pred_check
          %p179 = pneg %p79
        $region34: #{tpu_custom_call.1} parent=27 // pred_check_branch
          %181 = sbr.rel (%p179) target = $region36
        $region35: #{tpu_custom_call.1} parent=27 // pred_region
          %182 = dma.done %s175, 2048
        $region36: #{tpu_custom_call.1} parent=27 // pred_fallthru
          _
        %p183 = pneg %p53
        %p184 = pneg %p50
        %s185 = sand.u32 %s66, 1
        %s186 = scalar_lea.sflag [#allocation6], %s185
        %s187 = sand.u32 %s66, 1
        %s188 = smul.addr %s187, 128
        %s189 = scalar_lea.vmem [#allocation5], %s188
        %p190 = pneg %p79
        %p191 = pneg %p76
        %p192 = pneg %p107
        %p193 = pneg %p104
        %s194 = sand.u32 %s94, 1
        %s195 = scalar_lea.sflag [#allocation4], %s194
        %s196 = sand.u32 %s94, 1
        %s197 = smul.addr %s196, 32
        %s198 = scalar_lea.vmem [#allocation7], %s197
        %s199 = smul.u32 2, %s24
        %s200 = smul.u32 32, %s25
        %s201 = smul.u32 2, %s24
        %s202 = smul.u32 2, %s25
        %v204 = vld [vmem:[#allocation2] sm:$0xf]
        %v205 = vld [vmem:[#allocation2 + $0x4] sm:$0xf]
        %v206 = vld [vmem:[%s178] sm:$0xf]
        %v207 = vld [vmem:[%s178 + $0x4] sm:$0xf]
        %v208 = vld [vmem:[%s178 + $0x8] sm:$0xf]
        %v209 = vld [vmem:[%s178 + $0xc] sm:$0xf]
        %v210 = vld [vmem:[%s178 + $0x10] sm:$0xf]
        %v211 = vld [vmem:[%s178 + $0x14] sm:$0xf]
        %v212 = vld [vmem:[%s178 + $0x18] sm:$0xf]
        %v213 = vld [vmem:[%s178 + $0x1c] sm:$0xf]
        %v214 = vld [vmem:[%s178 + $0x20] sm:$0xf]
        %v215 = vld [vmem:[%s178 + $0x24] sm:$0xf]
        %v216 = vld [vmem:[%s178 + $0x28] sm:$0xf]
        %v217 = vld [vmem:[%s178 + $0x2c] sm:$0xf]
        %v218 = vld [vmem:[%s178 + $0x30] sm:$0xf]
        %v219 = vld [vmem:[%s178 + $0x34] sm:$0xf]
        %v220 = vld [vmem:[%s178 + $0x38] sm:$0xf]
        %v221 = vld [vmem:[%s178 + $0x3c] sm:$0xf]
        %v222 = vld [vmem:[%s178 + $0x40] sm:$0xf]
        %v223 = vld [vmem:[%s178 + $0x44] sm:$0xf]
        %v224 = vld [vmem:[%s178 + $0x48] sm:$0xf]
        %v225 = vld [vmem:[%s178 + $0x4c] sm:$0xf]
        %v226 = vld [vmem:[%s178 + $0x50] sm:$0xf]
        %v227 = vld [vmem:[%s178 + $0x54] sm:$0xf]
        %v228 = vld [vmem:[%s178 + $0x58] sm:$0xf]
        %v229 = vld [vmem:[%s178 + $0x5c] sm:$0xf]
        %v230 = vld [vmem:[%s178 + $0x60] sm:$0xf]
        %v231 = vld [vmem:[%s178 + $0x64] sm:$0xf]
        %v232 = vld [vmem:[%s178 + $0x68] sm:$0xf]
        %v233 = vld [vmem:[%s178 + $0x6c] sm:$0xf]
        %v234 = vld [vmem:[%s178 + $0x70] sm:$0xf]
        %v235 = vld [vmem:[%s178 + $0x74] sm:$0xf]
        %v236 = vld [vmem:[%s178 + $0x78] sm:$0xf]
        %v237 = vld [vmem:[%s178 + $0x7c] sm:$0xf]
        %v240 = vunpack.c.l.b16 %v204
        %v241 = vunpack.c.l.b16 %v205
        %v242 = vpack.c.b16 %v241, %v240
        %v276 = vunpack.c.l.b16 %v206
        %v277 = vunpack.c.l.b16 %v207
        %v278 = vunpack.c.l.b16 %v208
        %v279 = vunpack.c.l.b16 %v209
        %v280 = vunpack.c.l.b16 %v210
        %v281 = vunpack.c.l.b16 %v211
        %v282 = vunpack.c.l.b16 %v212
        %v283 = vunpack.c.l.b16 %v213
        %v284 = vunpack.c.l.b16 %v214
        %v285 = vunpack.c.l.b16 %v215
        %v286 = vunpack.c.l.b16 %v216
        %v287 = vunpack.c.l.b16 %v217
        %v288 = vunpack.c.l.b16 %v218
        %v289 = vunpack.c.l.b16 %v219
        %v290 = vunpack.c.l.b16 %v220
        %v291 = vunpack.c.l.b16 %v221
        %v292 = vunpack.c.l.b16 %v222
        %v293 = vunpack.c.l.b16 %v223
        %v294 = vunpack.c.l.b16 %v224
        %v295 = vunpack.c.l.b16 %v225
        %v296 = vunpack.c.l.b16 %v226
        %v297 = vunpack.c.l.b16 %v227
        %v298 = vunpack.c.l.b16 %v228
        %v299 = vunpack.c.l.b16 %v229
        %v300 = vunpack.c.l.b16 %v230
        %v301 = vunpack.c.l.b16 %v231
        %v302 = vunpack.c.l.b16 %v232
        %v303 = vunpack.c.l.b16 %v233
        %v304 = vunpack.c.l.b16 %v234
        %v305 = vunpack.c.l.b16 %v235
        %v306 = vunpack.c.l.b16 %v236
        %v307 = vunpack.c.l.b16 %v237
        %v308 = vpack.c.b16 %v277, %v276
        %v309 = vpack.c.b16 %v279, %v278
        %v310 = vpack.c.b16 %v281, %v280
        %v311 = vpack.c.b16 %v283, %v282
        %v312 = vpack.c.b16 %v285, %v284
        %v313 = vpack.c.b16 %v287, %v286
        %v314 = vpack.c.b16 %v289, %v288
        %v315 = vpack.c.b16 %v291, %v290
        %v316 = vpack.c.b16 %v293, %v292
        %v317 = vpack.c.b16 %v295, %v294
        %v318 = vpack.c.b16 %v297, %v296
        %v319 = vpack.c.b16 %v299, %v298
        %v320 = vpack.c.b16 %v301, %v300
        %v321 = vpack.c.b16 %v303, %v302
        %v322 = vpack.c.b16 %v305, %v304
        %v323 = vpack.c.b16 %v307, %v306
        %340 = vmatprep.subr.bf16.mxu0 0
        %341 = vmatpush1.bf16.xpose.msra.mxu0 %v315
        %342 = vmatprep.subr.bf16.mxu0 0
        %343 = vmatpush1.bf16.xpose.msra.mxu0 %v314
        %344 = vmatprep.subr.bf16.mxu0 0
        %345 = vmatpush1.bf16.xpose.msra.mxu0 %v313
        %346 = vmatprep.subr.bf16.mxu0 0
        %347 = vmatpush1.bf16.xpose.msra.mxu0 %v312
        %348 = vmatprep.subr.bf16.mxu0 0
        %349 = vmatpush1.bf16.xpose.msra.mxu0 %v311
        %350 = vmatprep.subr.bf16.mxu0 0
        %351 = vmatpush1.bf16.xpose.msra.mxu0 %v310
        %352 = vmatprep.subr.bf16.mxu0 0
        %353 = vmatpush1.bf16.xpose.msra.mxu0 %v309
        %354 = vmatprep.subr.bf16.mxu0 0
        %355 = vmatpush1.bf16.xpose.msra.mxu0 %v308
        %356 = vmatprep.subr.bf16.mxu0 0
        %357 = vmatpush2.bf16.xpose.msra.mxu0 %v323
        %358 = vmatprep.subr.bf16.mxu0 0
        %359 = vmatpush2.bf16.xpose.msra.mxu0 %v322
        %360 = vmatprep.subr.bf16.mxu0 0
        %361 = vmatpush2.bf16.xpose.msra.mxu0 %v321
        %362 = vmatprep.subr.bf16.mxu0 0
        %363 = vmatpush2.bf16.xpose.msra.mxu0 %v320
        %364 = vmatprep.subr.bf16.mxu0 0
        %365 = vmatpush2.bf16.xpose.msra.mxu0 %v319
        %366 = vmatprep.subr.bf16.mxu0 0
        %367 = vmatpush2.bf16.xpose.msra.mxu0 %v318
        %368 = vmatprep.subr.bf16.mxu0 0
        %369 = vmatpush2.bf16.xpose.msra.mxu0 %v317
        %370 = vmatprep.subr.bf16.mxu0 0
        %371 = vmatpush2.bf16.xpose.msra.mxu0 %v316
        %372 = vmatprep.mubr.bf16.mxu0 0
        %373 = vmatmul.mubr.bf16.gmra.mxu0 %v242
        %v374 = vpop.f32.mrf.mxu0
        %v375 = vadd.f32 0.0, %v374
        %v376 = vpop.f32.mrf.mxu0
        %v377 = vadd.f32 0.0, %v376
        %v378 = vpop.f32.mrf.mxu0
        %v379 = vadd.f32 0.0, %v378
        %v380 = vpop.f32.mrf.mxu0
        %v381 = vadd.f32 0.0, %v380
        %382 = vdwg.mxu0
        %383 = vst [vmem:[%s198] sm:$0xff] %v375
        %384 = vst [vmem:[%s198 + $0x8] sm:$0xff] %v377
        %385 = vst [vmem:[%s198 + $0x10] sm:$0xff] %v379
        %386 = vst [vmem:[%s198 + $0x18] sm:$0xff] %v381
        %s387 = sand.u32 %s94, 1
        %s388 = scalar_lea.sflag [#allocation4], %s387
        %s389 = sand.u32 %s94, 1
        %s390 = smul.addr %s389, 32
        %s391 = scalar_lea.vmem [#allocation7], %s390
        // Predicated region
        $region37: #{tpu_custom_call.1} parent=27 // pred_check
          %p392 = pneg %p104
        $region38: #{tpu_custom_call.1} parent=27 // pred_check_branch
          %394 = sbr.rel (%p392) target = $region40
        $region39: #{tpu_custom_call.1} parent=27 // pred_region
          %s395 = smul.u32 2, %s24
          %s396 = smul.u32 2, %s25
          %s398 = ssub.s32 512, 512
          %399 = vsyncadd %s388, %s398
          %s400 = smul.addr %s395, 4
          %s401 = sadd.s32 %s396, %s400
          %s402 = smul.addr %s401, 128
          %s403 = scalar_lea.hbm %s2, %s402
          %s404 = sshll.u32 %s391, 4
          %s405 = int_to_ptr.vmem [resolvable:$true] %s404
          %410 = dma.vmem_to_hbm [thread:$0]  %s405, 512, %s403, %s388, 256, 512, 16
        $region40: #{tpu_custom_call.1} parent=27 // pred_fallthru
          _
      $region28: #{tpu_custom_call.1} parent=5 // pred_fallthru
        _
      %p411 = scmp.le.s32.totalorder 2, %s15
      // Predicated region
      $region41: #{tpu_custom_call.1} parent=5 // pred_check
        %p412 = pneg %p411
      $region42: #{tpu_custom_call.1} parent=5 // pred_check_branch
        %414 = sbr.rel (%p412) target = $region44
      $region43: #{tpu_custom_call.1} parent=5 // pred_region
        %s415 = ssub.s32 %s15, 2
        // Predicated region
        $region45: #{tpu_custom_call.1} parent=43 // pred_check
          %p416 = pneg %p110
        $region46: #{tpu_custom_call.1} parent=43 // pred_check_branch
          %418 = sbr.rel (%p416) target = $region48
        $region47: #{tpu_custom_call.1} parent=43 // pred_region
          %s419 = sand.u32 %s95, 1
          %s420 = scalar_lea.sflag [#allocation4], %s419
          %s421 = sand.u32 %s95, 1
          %s422 = smul.addr %s421, 32
          %s423 = scalar_lea.vmem [#allocation7], %s422
          %424 = dma.done %s420, 512
        $region48: #{tpu_custom_call.1} parent=43 // pred_fallthru
          _
      $region44: #{tpu_custom_call.1} parent=5 // pred_fallthru
        _
    $region6: #{tpu_custom_call.1} parent=1 // loop_footer
      %s19 = sadd.s32 1, %s15
    $region7: #{tpu_custom_call.1} parent=1 // loop_footer_branch
      %14 = sbr.rel target = $region3
    $region8: #{tpu_custom_call.1} parent=1 // loop_exit
      _
    %425 = vsyncpa [#allocation3], 1
    %s426 = scalar_lea.sflag [#allocation3], 1
    %427 = vsyncpa %s426, 1
    %428 = vsyncpa [#allocation6], 1
    %s429 = scalar_lea.sflag [#allocation6], 1
    %430 = vsyncpa %s429, 1
    %431 = vsyncpa [#allocation4], 1
    %s432 = scalar_lea.sflag [#allocation4], 1
    %433 = vsyncpa %s432, 1

</llo_original>
